<compile_context>
chip_gen: v6e
topology: v6e:2x2x1
jax: 0.10.0
libtpu: 0.0.40
codegen_flags: <defaults>
</compile_context>

<pallas_src>
import functools

import jax
import jax.numpy as jnp
from jax import lax
from jax.experimental import pallas as pl
from jax.experimental.pallas import tpu as pltpu


def _round_up(x, m):
    return (x + m - 1) // m * m


def _attention_kernel(q_ref, k_ref, w_ref, b_ref, y_ref, attn_ref, *, dim):
    # q_ref   : (TQ, D)   query tile ("output" in the PyTorch code)
    # k_ref   : (Lk, D)   full context for this batch element
    # w_ref   : (2D, D)   linear_out.weight.T, bf16 (rows [:D]->mix, [D:]->output)
    # b_ref   : (1,  D)   linear_out.bias, f32
    # y_ref   : (TQ, D)   tanh(linear_out([mix, output]))
    # attn_ref: (TQ, Lk)  softmax attention weights
    q = q_ref[...]
    k = k_ref[...]

    # scores = output @ context^T : contract the D axes directly (no XLU
    # transpose of k).  Kept in f32: the module masks on exact equality with 0,
    # which bf16 rounding could perturb for genuinely non-zero scores.
    scores = lax.dot_general(
        q, k,
        dimension_numbers=(((1,), (1,)), ((), ())),
        preferred_element_type=jnp.float32)                      # (TQ, Lk)

    # masked_fill_(scores == 0, -inf)
    scores = jnp.where(scores == 0.0, -jnp.inf, scores)

    # Row softmax in f32.  Exact reciprocal on the tiny (TQ, 1) denominator so
    # the *returned* attention weights are exactly normalized.
    m = jnp.max(scores, axis=-1, keepdims=True)
    e = jnp.exp(scores - m)
    denom = jnp.sum(e, axis=-1, keepdims=True)
    attn = e * (1.0 / denom)                                     # (TQ, Lk) f32

    # mix = attn @ context, bf16 operands + f32 accumulation (full-rate MXU).
    mix = jnp.dot(attn.astype(jnp.bfloat16), k.astype(jnp.bfloat16),
                  preferred_element_type=jnp.float32)            # (TQ, D)

    # linear_out(cat(mix, output)) == mix @ W^T[:D] + output @ W^T[D:] + b
    # Both projection matmuls in bf16 (weight is already bf16-resident).
    d = dim
    y = jnp.dot(mix.astype(jnp.bfloat16), w_ref[:d, :],
                preferred_element_type=jnp.float32)
    y = y + jnp.dot(q.astype(jnp.bfloat16), w_ref[d:, :],
                    preferred_element_type=jnp.float32)
    y = jnp.tanh(y + b_ref[...])                                 # (TQ, D) f32

    y_ref[...] = y.astype(y_ref.dtype)
    attn_ref[...] = attn.astype(attn_ref.dtype)


def _vmem_capacity_bytes():
    """Per-core VMEM capacity with a conservative fallback (v7x = 64 MiB/TC)."""
    try:
        cap = getattr(pltpu.get_tpu_info(), "vmem_capacity_bytes", None)
        if cap:
            return int(cap)
    except Exception:
        pass
    return 64 * 1024 * 1024


def _pick_tq(lq, lk, d, budget_bytes):
    """Largest query tile (multiple of 8) whose double-buffered pipeline blocks
    plus live in-kernel intermediates fit the VMEM planning budget.  VMEM
    buffers are (8, 128)-tiled, so trailing dims are accounted padded."""
    lkp = _round_up(lk, 128)
    dp = _round_up(d, 128)
    lq8 = _round_up(max(lq, 8), 8)
    f32, bf16 = 4, 2
    for tq in (1024, 512, 256, 128, 64, 32, 16, 8):
        if tq > lq8:
            continue
        blocks = (2 * f32 * tq * dp          # q tile (double-buffered)
                  + 2 * f32 * lkp * dp       # context (double-buffered)
                  + 2 * f32 * tq * dp        # y out tile
                  + 2 * f32 * tq * lkp)      # attn out tile
        weights = 2 * (bf16 * 2 * d * dp + f32 * dp)   # W^T (bf16) + bias
        live = (f32 * (3 * tq * lkp + 2 * tq * dp)     # scores/e/attn + mix/y
                + bf16 * (tq * lkp + tq * dp))         # bf16 casts
        if blocks + weights + live <= budget_bytes:
            return tq
    return 8


def attention_forward(output, context, weight, bias):
    """output: (B, Lq, D), context: (B, Lk, D),
       weight: (D, 2D) as in nn.Linear(dim*2, dim), bias: (D,).
       Returns (y: (B, Lq, D), attn: (B, Lq, Lk))."""
    B, Lq, D = output.shape
    _, Lk, _ = context.shape

    # Single per-generation VMEM number drives both the tile plan and the
    # compiler limit (≈ 90 MiB on 128-MiB parts, ≈ 45 MiB on 64-MiB v7x).
    vmem_cap = _vmem_capacity_bytes()
    vmem_limit = min(max(int(vmem_cap * 0.70), 32 * 1024 * 1024),
                     96 * 1024 * 1024)
    TQ = _pick_tq(Lq, Lk, D, int(vmem_limit * 0.85))   # headroom for scratch
    nq = pl.cdiv(Lq, TQ)

    # No wrapper-side padding: ragged last query tile handled by Pallas
    # partial blocks; key axis kept at its natural extent.
    w_t = weight.T.astype(jnp.bfloat16)     # (2D, D), rows [:D]->mix, [D:]->output
    b2d = bias.reshape(1, D).astype(jnp.float32)

    # Batch-major grid so the per-batch context block is DMA'd once per batch.
    # When B == 1, collapse to a 1-D query-tile grid so the parallel axis with
    # extent > 1 leads (v7x megacore sharding).
    if B == 1:
        grid = (nq,)
        dims = ("parallel",)
        q_map    = lambda qi: (0, qi, 0)
        ctx_map  = lambda qi: (0, 0, 0)
        w_map    = lambda qi: (0, 0)
        b_map    = lambda qi: (0, 0)
        attn_map = lambda qi: (0, qi, 0)
    else:
        grid = (B, nq)
        dims = ("parallel", "parallel")
        q_map    = lambda b, qi: (b, qi, 0)
        ctx_map  = lambda b, qi: (b, 0, 0)
        w_map    = lambda b, qi: (0, 0)
        b_map    = lambda b, qi: (0, 0)
        attn_map = lambda b, qi: (b, qi, 0)

    grid_spec = pltpu.PrefetchScalarGridSpec(
        num_scalar_prefetch=0,
        grid=grid,
        in_specs=[
            pl.BlockSpec((None, TQ, D), q_map),       # query tile (leading dim squeezed)
            pl.BlockSpec((None, Lk, D), ctx_map),     # full context for this batch elem
            pl.BlockSpec((2 * D, D), w_map),          # W^T (bf16, resident)
            pl.BlockSpec((1, D), b_map),              # bias
        ],
        out_specs=[
            pl.BlockSpec((None, TQ, D), q_map),
            pl.BlockSpec((None, TQ, Lk), attn_map),
        ],
    )

    y, attn = pl.pallas_call(
        functools.partial(_attention_kernel, dim=D),
        out_shape=(
            jax.ShapeDtypeStruct((B, Lq, D), output.dtype),
            jax.ShapeDtypeStruct((B, Lq, Lk), output.dtype),
        ),
        grid_spec=grid_spec,
        compiler_params=pltpu.CompilerParams(
            dimension_semantics=dims,
            vmem_limit_bytes=vmem_limit),
    )(output, context, w_t, b2d)

    return y, attn


def _reference(output, context, weight, bias):
    # Pure-JAX reference mirroring the PyTorch code (full f32 precision).
    hi = lax.Precision.HIGHEST
    attn = jnp.einsum('bqd,bkd->bqk', output, context, precision=hi)
    attn = jnp.where(attn == 0.0, -jnp.inf, attn)
    attn = jax.nn.softmax(attn, axis=-1)
    mix = jnp.einsum('bqk,bkd->bqd', attn, context, precision=hi)
    combined = jnp.concatenate([mix, output], axis=-1)
    y = jnp.tanh(jnp.einsum('bqe,de->bqd', combined, weight, precision=hi) + bias)
    return y, attn


if __name__ == "__main__":
    D = 32
    key = jax.random.PRNGKey(0)
    k_out, k_ctx, k_w, k_b = jax.random.split(key, 4)

    # nn.Linear(dim*2, dim): weight (D, 2D), bias (D,) -- deterministic init.
    bound = 1.0 / jnp.sqrt(2.0 * D)
    weight = jax.random.uniform(k_w, (D, 2 * D), minval=-bound, maxval=bound,
                                dtype=jnp.float32)
    bias = jax.random.uniform(k_b, (D,), minval=-bound, maxval=bound,
                              dtype=jnp.float32)

    # Exercise both the batch-major (B>1) and the 1-D (B==1) grid paths.
    for B, Lq, Lk in ((2, 8, 8), (1, 8, 8)):
        output = jax.random.normal(k_out, (B, Lq, D), dtype=jnp.float32)
        context = jax.random.normal(k_ctx, (B, Lk, D), dtype=jnp.float32)

        y, attn = attention_forward(output, context, weight, bias)
        jax.block_until_ready((y, attn))

        y_ref, attn_ref = _reference(output, context, weight, bias)
        # attn is computed fully in f32 with exact normalization -> tight tol.
        assert jnp.allclose(attn, attn_ref, atol=1e-4, rtol=1e-4), "attn mismatch"
        # y goes through bf16 MXU matmuls (f32 accumulation) -> bf16-level tol.
        assert jnp.allclose(y, y_ref, atol=2e-2, rtol=2e-2), "y mismatch"

    print("KERNEL_OK")
</pallas_src>

<mosaic_0001>
module attributes {stable_mosaic.version = 11 : i64} {
  func.func @_attention_kernel(%arg0: i32, %arg1: i32, %arg2: memref<1x8x32xf32, #tpu.memory_space<vmem>>, %arg3: memref<1x8x32xf32, #tpu.memory_space<vmem>>, %arg4: memref<64x32xbf16, #tpu.memory_space<vmem>>, %arg5: memref<1x32xf32, #tpu.memory_space<vmem>>, %arg6: memref<1x8x32xf32, #tpu.memory_space<vmem>>, %arg7: memref<1x8x8xf32, #tpu.memory_space<vmem>>) attributes {dimension_semantics = [#tpu.dimension_semantics<parallel>, #tpu.dimension_semantics<parallel>], iteration_bounds = array<i64: 2, 1>, scalar_prefetch = 0 : i64, scratch_operands = 0 : i64, tpu.core_type = #tpu.core_type<tc>, window_params = [{transform_indices = @transform_0, window_bounds = array<i64: 1, 8, 32>}, {transform_indices = @transform_1, window_bounds = array<i64: 1, 8, 32>}, {pipeline_mode = #tpu.pipeline_mode<synchronous>, transform_indices = @transform_2, window_bounds = array<i64: 64, 32>}, {pipeline_mode = #tpu.pipeline_mode<synchronous>, transform_indices = @transform_3, window_bounds = array<i64: 1, 32>}, {transform_indices = @transform_4, window_bounds = array<i64: 1, 8, 32>}, {transform_indices = @transform_5, window_bounds = array<i64: 1, 8, 8>}]} {
    %c0 = arith.constant 0 : index
    %c0_0 = arith.constant 0 : index
    %c0_1 = arith.constant 0 : index
    %0 = vector.load %arg2[%c0, %c0_0, %c0_1] : memref<1x8x32xf32, #tpu.memory_space<vmem>>, vector<1x8x32xf32>
    %1 = vector.shape_cast %0 : vector<1x8x32xf32> to vector<8x32xf32>
    %c0_2 = arith.constant 0 : index
    %c0_3 = arith.constant 0 : index
    %c0_4 = arith.constant 0 : index
    %2 = vector.load %arg3[%c0_2, %c0_3, %c0_4] : memref<1x8x32xf32, #tpu.memory_space<vmem>>, vector<1x8x32xf32>
    %3 = vector.shape_cast %2 : vector<1x8x32xf32> to vector<8x32xf32>
    %cst = arith.constant dense<0.000000e+00> : vector<8x8xf32>
    %4 = tpu.matmul %1, %3, %cst {dimension_numbers = #tpu.dot_dimension_numbers<[1], [1], [0], [0], [0, 0, 1, 0], [], []>} : vector<8x32xf32>, vector<8x32xf32>, vector<8x8xf32> -> vector<8x8xf32>
    %cst_5 = arith.constant 0.000000e+00 : f32
    %5 = vector.broadcast %cst_5 : f32 to vector<8x8xf32>
    %6 = arith.cmpf oeq, %4, %5 : vector<8x8xf32>
    %cst_6 = arith.constant 0xFF800000 : f32
    %7 = vector.broadcast %cst_6 : f32 to vector<8x8xf32>
    %8 = arith.select %6, %7, %4 : vector<8x8xi1>, vector<8x8xf32>
    %cst_7 = arith.constant dense<0xFF800000> : vector<8xf32>
    %9 = vector.multi_reduction <maximumf>, %8, %cst_7 [1] : vector<8x8xf32> to vector<8xf32>
    %10 = vector.shape_cast %9 : vector<8xf32> to vector<8x1xf32>
    %11 = vector.broadcast %10 : vector<8x1xf32> to vector<8x8xf32>
    %12 = arith.subf %8, %11 : vector<8x8xf32>
    %13 = math.exp %12 : vector<8x8xf32>
    %cst_8 = arith.constant dense<0.000000e+00> : vector<8xf32>
    %14 = vector.multi_reduction <add>, %13, %cst_8 [1] : vector<8x8xf32> to vector<8xf32>
    %15 = vector.shape_cast %14 : vector<8xf32> to vector<8x1xf32>
    %cst_9 = arith.constant 1.000000e+00 : f32
    %16 = vector.broadcast %cst_9 : f32 to vector<8x1xf32>
    %17 = arith.divf %16, %15 : vector<8x1xf32>
    %18 = vector.broadcast %17 : vector<8x1xf32> to vector<8x8xf32>
    %19 = arith.mulf %13, %18 : vector<8x8xf32>
    %20 = arith.truncf %19 : vector<8x8xf32> to vector<8x8xbf16>
    %21 = arith.truncf %3 : vector<8x32xf32> to vector<8x32xbf16>
    %cst_10 = arith.constant dense<0.000000e+00> : vector<8x32xf32>
    %22 = tpu.matmul %20, %21, %cst_10 {dimension_numbers = #tpu.dot_dimension_numbers<[1], [0], [0], [1], [0, 0, 1, 1], [], []>} : vector<8x8xbf16>, vector<8x32xbf16>, vector<8x32xf32> -> vector<8x32xf32>
    %23 = arith.truncf %22 : vector<8x32xf32> to vector<8x32xbf16>
    %c0_11 = arith.constant 0 : index
    %c0_12 = arith.constant 0 : index
    %24 = vector.load %arg4[%c0_11, %c0_12] : memref<64x32xbf16, #tpu.memory_space<vmem>>, vector<32x32xbf16>
    %cst_13 = arith.constant dense<0.000000e+00> : vector<8x32xf32>
    %25 = tpu.matmul %23, %24, %cst_13 {dimension_numbers = #tpu.dot_dimension_numbers<[1], [0], [0], [1], [0, 0, 1, 1], [], []>} : vector<8x32xbf16>, vector<32x32xbf16>, vector<8x32xf32> -> vector<8x32xf32>
    %26 = arith.truncf %1 : vector<8x32xf32> to vector<8x32xbf16>
    %c32 = arith.constant 32 : index
    %c0_14 = arith.constant 0 : index
    %27 = vector.load %arg4[%c32, %c0_14] : memref<64x32xbf16, #tpu.memory_space<vmem>>, vector<32x32xbf16>
    %cst_15 = arith.constant dense<0.000000e+00> : vector<8x32xf32>
    %28 = tpu.matmul %26, %27, %cst_15 {dimension_numbers = #tpu.dot_dimension_numbers<[1], [0], [0], [1], [0, 0, 1, 1], [], []>} : vector<8x32xbf16>, vector<32x32xbf16>, vector<8x32xf32> -> vector<8x32xf32>
    %29 = arith.addf %25, %28 : vector<8x32xf32>
    %c0_16 = arith.constant 0 : index
    %c0_17 = arith.constant 0 : index
    %30 = vector.load %arg5[%c0_16, %c0_17] : memref<1x32xf32, #tpu.memory_space<vmem>>, vector<1x32xf32>
    %31 = vector.broadcast %30 : vector<1x32xf32> to vector<8x32xf32>
    %32 = arith.addf %29, %31 : vector<8x32xf32>
    %33 = math.tanh %32 : vector<8x32xf32>
    %c0_18 = arith.constant 0 : index
    %c0_19 = arith.constant 0 : index
    %c0_20 = arith.constant 0 : index
    %34 = vector.load %arg6[%c0_18, %c0_19, %c0_20] : memref<1x8x32xf32, #tpu.memory_space<vmem>>, vector<1x8x32xf32>
    %35 = vector.shape_cast %34 : vector<1x8x32xf32> to vector<8x32xf32>
    %36 = vector.shape_cast %33 : vector<8x32xf32> to vector<1x8x32xf32>
    tpu.vector_store %arg6[%c0_18, %c0_19, %c0_20], %36 {strides = array<i32>} : memref<1x8x32xf32, #tpu.memory_space<vmem>>, vector<1x8x32xf32>,
    %c0_21 = arith.constant 0 : index
    %c0_22 = arith.constant 0 : index
    %c0_23 = arith.constant 0 : index
    %37 = vector.load %arg7[%c0_21, %c0_22, %c0_23] : memref<1x8x8xf32, #tpu.memory_space<vmem>>, vector<1x8x8xf32>
    %38 = vector.shape_cast %37 : vector<1x8x8xf32> to vector<8x8xf32>
    %39 = vector.shape_cast %19 : vector<8x8xf32> to vector<1x8x8xf32>
    tpu.vector_store %arg7[%c0_21, %c0_22, %c0_23], %39 {strides = array<i32>} : memref<1x8x8xf32, #tpu.memory_space<vmem>>, vector<1x8x8xf32>,
    return
  }
  func.func @transform_0(%arg0: i32, %arg1: i32) -> (i32, i32, i32) {
    %c0_i32 = arith.constant 0 : i32
    %c0_i32_0 = arith.constant 0 : i32
    return %arg0, %arg1, %c0_i32 : i32, i32, i32
  }
  func.func @transform_1(%arg0: i32, %arg1: i32) -> (i32, i32, i32) {
    %c0_i32 = arith.constant 0 : i32
    %c0_i32_0 = arith.constant 0 : i32
    %c0_i32_1 = arith.constant 0 : i32
    return %arg0, %c0_i32, %c0_i32_0 : i32, i32, i32
  }
  func.func @transform_2(%arg0: i32, %arg1: i32) -> (i32, i32) {
    %c0_i32 = arith.constant 0 : i32
    %c0_i32_0 = arith.constant 0 : i32
    %c0_i32_1 = arith.constant 0 : i32
    return %c0_i32, %c0_i32_0 : i32, i32
  }
  func.func @transform_3(%arg0: i32, %arg1: i32) -> (i32, i32) {
    %c0_i32 = arith.constant 0 : i32
    %c0_i32_0 = arith.constant 0 : i32
    %c0_i32_1 = arith.constant 0 : i32
    return %c0_i32, %c0_i32_0 : i32, i32
  }
  func.func @transform_4(%arg0: i32, %arg1: i32) -> (i32, i32, i32) {
    %c0_i32 = arith.constant 0 : i32
    %c0_i32_0 = arith.constant 0 : i32
    return %arg0, %arg1, %c0_i32 : i32, i32, i32
  }
  func.func @transform_5(%arg0: i32, %arg1: i32) -> (i32, i32, i32) {
    %c0_i32 = arith.constant 0 : i32
    %c0_i32_0 = arith.constant 0 : i32
    return %arg0, %arg1, %c0_i32 : i32, i32, i32
  }
}

</mosaic_0001>

<llo_original>
// kernel: tpu_custom_call.1
$region0: #{tpu_custom_call.1}
  #allocation0 [shape = 'u32[]', space=smem, size = 0x4, offset = 0x4, fixed_abs, tag = 'smem constant byte address 0x4 - core index']
  #allocation1 [shape = 'u32[144,128]{1,0:T(1,128)}', space=vmem, size = 0x12000, scoped, tag = 'internal scratch']
  %s0 = inlined_call_operand.vmem [shape: f32[2,8,32], index: 0, kind: input, shape index: {}]
  %s1 = inlined_call_operand.vmem [shape: f32[2,8,32], index: 1, kind: input, shape index: {}]
  %s2 = inlined_call_operand.vmem [shape: bf16[64,32], index: 2, kind: input, shape index: {}]
  %s3 = inlined_call_operand.vmem [shape: f32[1,32], index: 3, kind: input, shape index: {}]
  %s4 = inlined_call_operand.hbm [shape: f32[2,8,32], index: 4, kind: output, shape index: {0}]
  %s5 = inlined_call_operand.hbm [shape: f32[2,8,8], index: 5, kind: output, shape index: {1}]
  %6 = xla_tuple %s4, %s5
  %s7 = sld [smem:[#allocation0]]
  $region57: #{tpu_custom_call.1} parent=0
    _
  %s9 = ssub.s32 1, %s7
  %s10 = scalar_select 0, %s9, %s7
  $region1: #{tpu_custom_call.1} parent=0
    #allocation2 [shape = 'u8[8192]{0}', space=vmem, size = 0x2000, scoped, tag = 'output window, operand 0']
    #allocation3 [shape = 's32[2]{0}', space=sflag, size = 0x8, scoped, tag = 'scoped memory for tpu_custom_call.1']
    #allocation4 [shape = 'u8[8192]{0}', space=vmem, size = 0x2000, scoped, tag = 'output window, operand 1']
    #allocation5 [shape = 's32[2]{0}', space=sflag, size = 0x8, scoped, tag = 'scoped memory for tpu_custom_call.1']
    %11 = vsyncpa [#allocation3], 0
    %s12 = scalar_lea.sflag [#allocation3], 1
    %13 = vsyncpa %s12, 0
    %14 = vsyncpa [#allocation5], 0
    %s15 = scalar_lea.sflag [#allocation5], 1
    %16 = vsyncpa %s15, 0
    loop: start=0, step=1, limit=4
    $region2: #{tpu_custom_call.1} parent=1 // loop_pre_header
      _
    $region3: #{tpu_custom_call.1} parent=1 // loop_header
      %s18 = sphi 0, %s22
      %p19 = scmp.ge.s32.totalorder %s18, 4
      %s25 = sphi 0, %s37
      %s26 = sphi 0, %s33
      %s27 = sphi 0, %s25
      %s28 = sphi 0, %s26
      %s29 = sphi 0, %s27
      %s30 = sphi 0, %s28
      %s42 = sphi 0, %s44
      %s45 = sphi 0, %s42
      %s46 = sphi 0, %s45
      %s62 = sphi 0, %s46
      %s68 = sphi 0, %s70
      %s71 = sphi 0, %s68
      %s72 = sphi 0, %s71
      %s88 = sphi 0, %s72
      %s92 = sphi 0, %s92
      %s94 = sphi 0, %s92
      %s95 = sphi 0, %s94
      %s109 = sphi 0, %s95
      %s113 = sphi 0, %s113
      %s115 = sphi 0, %s113
      %s116 = sphi 0, %s115
      %s130 = sphi 0, %s116
      %s138 = sphi 0, %s140
      %s141 = sphi 0, %s138
      %s142 = sphi 0, %s141
      %s158 = sphi 0, %s142
      %s166 = sphi 0, %s168
      %s169 = sphi 0, %s166
      %s170 = sphi 0, %s169
      %s186 = sphi 0, %s170
    $region4: #{tpu_custom_call.1} parent=1 // loop_header_branch
      %21 = sbr.rel (%p19) target = $region8
    $region5: #{tpu_custom_call.1} parent=1 // loop_body
      %s23 = ssub.s32 %s18, 1
      %s24 = ssub.s32 %s18, 2
      %s31 = sadd.s32 1, %s26
      %p32 = scmp.ge.s32.totalorder %s31, 1
      %s33 = scalar_select %p32, 0, %s31
      %s34 = sadd.s32 1, %s25
      %s35 = scalar_select %p32, %s34, %s25
      %p36 = scmp.ge.s32.totalorder %s35, 2
      %s37 = scalar_select %p36, 0, %s35
      %s38 = ssub.s32 %s25, %s37
      %s39 = ssub.s32 %s26, %s33
      %s40 = sor.u32 %s38, %s39
      %p41 = scmp.eq.s32.totalorder %s40, 0
      %s43 = sadd.s32 %s42, 1
      %s44 = scalar_select %p41, %s42, %s43
      %p47 = pneg %p41
      %p48 = scmp.eq.s32.totalorder %s18, 1
      %p49 = por %p47, %p48
      %p50 = scmp.ne.s32.totalorder %s42, %s45
      %p51 = scmp.eq.s32.totalorder %s18, 0
      %p52 = por %p50, %p51
      %p53 = scmp.ne.s32.totalorder %s42, %s45
      %p54 = scmp.eq.s32.totalorder %s23, 1
      %p55 = por %p53, %p54
      %p56 = scmp.ne.s32.totalorder %s45, %s46
      %p57 = scmp.eq.s32.totalorder %s23, 0
      %p58 = por %p56, %p57
      %p59 = scmp.ne.s32.totalorder %s45, %s46
      %p60 = scmp.eq.s32.totalorder %s24, 1
      %p61 = por %p59, %p60
      %p63 = scmp.ne.s32.totalorder %s46, %s62
      %p64 = scmp.eq.s32.totalorder %s24, 0
      %p65 = por %p63, %p64
      %s66 = ssub.s32 %s25, %s37
      %p67 = scmp.eq.s32.totalorder %s66, 0
      %s69 = sadd.s32 %s68, 1
      %s70 = scalar_select %p67, %s68, %s69
      %p73 = pneg %p67
      %p74 = scmp.eq.s32.totalorder %s18, 1
      %p75 = por %p73, %p74
      %p76 = scmp.ne.s32.totalorder %s68, %s71
      %p77 = scmp.eq.s32.totalorder %s18, 0
      %p78 = por %p76, %p77
      %p79 = scmp.ne.s32.totalorder %s68, %s71
      %p80 = scmp.eq.s32.totalorder %s23, 1
      %p81 = por %p79, %p80
      %p82 = scmp.ne.s32.totalorder %s71, %s72
      %p83 = scmp.eq.s32.totalorder %s23, 0
      %p84 = por %p82, %p83
      %p85 = scmp.ne.s32.totalorder %s71, %s72
      %p86 = scmp.eq.s32.totalorder %s24, 1
      %p87 = por %p85, %p86
      %p89 = scmp.ne.s32.totalorder %s72, %s88
      %p90 = scmp.eq.s32.totalorder %s24, 0
      %p91 = por %p89, %p90
      %s93 = sadd.s32 %s92, 1
      %p96 = scmp.eq.s32.totalorder %s18, 1
      %p97 = scmp.ne.s32.totalorder %s92, %s94
      %p98 = scmp.eq.s32.totalorder %s18, 0
      %p99 = por %p97, %p98
      %p100 = scmp.ne.s32.totalorder %s92, %s94
      %p101 = scmp.eq.s32.totalorder %s23, 1
      %p102 = por %p100, %p101
      %p103 = scmp.ne.s32.totalorder %s94, %s95
      %p104 = scmp.eq.s32.totalorder %s23, 0
      %p105 = por %p103, %p104
      %p106 = scmp.ne.s32.totalorder %s94, %s95
      %p107 = scmp.eq.s32.totalorder %s24, 1
      %p108 = por %p106, %p107
      %p110 = scmp.ne.s32.totalorder %s95, %s109
      %p111 = scmp.eq.s32.totalorder %s24, 0
      %p112 = por %p110, %p111
      %s114 = sadd.s32 %s113, 1
      %p117 = scmp.eq.s32.totalorder %s18, 1
      %p118 = scmp.ne.s32.totalorder %s113, %s115
      %p119 = scmp.eq.s32.totalorder %s18, 0
      %p120 = por %p118, %p119
      %p121 = scmp.ne.s32.totalorder %s113, %s115
      %p122 = scmp.eq.s32.totalorder %s23, 1
      %p123 = por %p121, %p122
      %p124 = scmp.ne.s32.totalorder %s115, %s116
      %p125 = scmp.eq.s32.totalorder %s23, 0
      %p126 = por %p124, %p125
      %p127 = scmp.ne.s32.totalorder %s115, %s116
      %p128 = scmp.eq.s32.totalorder %s24, 1
      %p129 = por %p127, %p128
      %p131 = scmp.ne.s32.totalorder %s116, %s130
      %p132 = scmp.eq.s32.totalorder %s24, 0
      %p133 = por %p131, %p132
      %s134 = ssub.s32 %s25, %s37
      %s135 = ssub.s32 %s26, %s33
      %s136 = sor.u32 %s134, %s135
      %p137 = scmp.eq.s32.totalorder %s136, 0
      %s139 = sadd.s32 %s138, 1
      %s140 = scalar_select %p137, %s138, %s139
      %p143 = pneg %p137
      %p144 = scmp.eq.s32.totalorder %s18, 1
      %p145 = por %p143, %p144
      %p146 = scmp.ne.s32.totalorder %s138, %s141
      %p147 = scmp.eq.s32.totalorder %s18, 0
      %p148 = por %p146, %p147
      %p149 = scmp.ne.s32.totalorder %s138, %s141
      %p150 = scmp.eq.s32.totalorder %s23, 1
      %p151 = por %p149, %p150
      %p152 = scmp.ne.s32.totalorder %s141, %s142
      %p153 = scmp.eq.s32.totalorder %s23, 0
      %p154 = por %p152, %p153
      %p155 = scmp.ne.s32.totalorder %s141, %s142
      %p156 = scmp.eq.s32.totalorder %s24, 1
      %p157 = por %p155, %p156
      %p159 = scmp.ne.s32.totalorder %s142, %s158
      %p160 = scmp.eq.s32.totalorder %s24, 0
      %p161 = por %p159, %p160
      %s162 = ssub.s32 %s25, %s37
      %s163 = ssub.s32 %s26, %s33
      %s164 = sor.u32 %s162, %s163
      %p165 = scmp.eq.s32.totalorder %s164, 0
      %s167 = sadd.s32 %s166, 1
      %s168 = scalar_select %p165, %s166, %s167
      %p171 = pneg %p165
      %p172 = scmp.eq.s32.totalorder %s18, 1
      %p173 = por %p171, %p172
      %p174 = scmp.ne.s32.totalorder %s166, %s169
      %p175 = scmp.eq.s32.totalorder %s18, 0
      %p176 = por %p174, %p175
      %p177 = scmp.ne.s32.totalorder %s166, %s169
      %p178 = scmp.eq.s32.totalorder %s23, 1
      %p179 = por %p177, %p178
      %p180 = scmp.ne.s32.totalorder %s169, %s170
      %p181 = scmp.eq.s32.totalorder %s23, 0
      %p182 = por %p180, %p181
      %p183 = scmp.ne.s32.totalorder %s169, %s170
      %p184 = scmp.eq.s32.totalorder %s24, 1
      %p185 = por %p183, %p184
      %p187 = scmp.ne.s32.totalorder %s170, %s186
      %p188 = scmp.eq.s32.totalorder %s24, 0
      %p189 = por %p187, %p188
      %p190 = scmp.le.s32.totalorder 1, %s18
      %p191 = scmp.lt.s32.totalorder %s18, 3
      %p192 = pnand %p190, %p191
      %p193 = pneg %p192
      // Predicated region
      $region9: #{tpu_custom_call.1} parent=5 // pred_check
        _
      $region10: #{tpu_custom_call.1} parent=5 // pred_check_branch
        %195 = sbr.rel (%p192) target = $region12
      $region11: #{tpu_custom_call.1} parent=5 // pred_region
        %s196 = ssub.s32 %s18, 1
        // Predicated region
        $region13: #{tpu_custom_call.1} parent=11 // pred_check
          %p197 = pneg %p105
        $region14: #{tpu_custom_call.1} parent=11 // pred_check_branch
          %199 = sbr.rel (%p197) target = $region16
        $region15: #{tpu_custom_call.1} parent=11 // pred_region
          _
        $region16: #{tpu_custom_call.1} parent=11 // pred_fallthru
          _
        // Predicated region
        $region17: #{tpu_custom_call.1} parent=11 // pred_check
          %p200 = pneg %p126
        $region18: #{tpu_custom_call.1} parent=11 // pred_check_branch
          %202 = sbr.rel (%p200) target = $region20
        $region19: #{tpu_custom_call.1} parent=11 // pred_region
          _
        $region20: #{tpu_custom_call.1} parent=11 // pred_fallthru
          _
      $region12: #{tpu_custom_call.1} parent=5 // pred_fallthru
        _
      %p203 = scmp.lt.s32.totalorder %s18, 2
      // Predicated region
      $region21: #{tpu_custom_call.1} parent=5 // pred_check
        %p204 = pneg %p203
      $region22: #{tpu_custom_call.1} parent=5 // pred_check_branch
        %206 = sbr.rel (%p204) target = $region24
      $region23: #{tpu_custom_call.1} parent=5 // pred_region
        // Predicated region
        $region25: #{tpu_custom_call.1} parent=23 // pred_check
          %p207 = pneg %p52
        $region26: #{tpu_custom_call.1} parent=23 // pred_check_branch
          %209 = sbr.rel (%p207) target = $region28
        $region27: #{tpu_custom_call.1} parent=23 // pred_region
          %p210 = scmp.lt.s32.totalorder %s25, 1
          %s211 = scalar_select %p210, %s25, 1
          %p212 = scmp.lt.s32.totalorder %s26, 0
          %s213 = scalar_select %p212, %s26, 0
          %s214 = sadd.s32 %s213, %s211
          %s215 = smul.addr %s214, 8
          %s216 = scalar_lea.vmem %s0, %s215
        $region28: #{tpu_custom_call.1} parent=23 // pred_fallthru
          _
        // Predicated region
        $region29: #{tpu_custom_call.1} parent=23 // pred_check
          %p217 = pneg %p78
        $region30: #{tpu_custom_call.1} parent=23 // pred_check_branch
          %219 = sbr.rel (%p217) target = $region32
        $region31: #{tpu_custom_call.1} parent=23 // pred_region
          %p220 = scmp.lt.s32.totalorder %s25, 1
          %s221 = scalar_select %p220, %s25, 1
          %s222 = smul.addr %s221, 8
          %s223 = scalar_lea.vmem %s1, %s222
        $region32: #{tpu_custom_call.1} parent=23 // pred_fallthru
          _
      $region24: #{tpu_custom_call.1} parent=5 // pred_fallthru
        _
      %p224 = scmp.le.s32.totalorder 1, %s18
      %p225 = scmp.lt.s32.totalorder %s18, 3
      %p226 = pnand %p224, %p225
      %p227 = pneg %p226
      // Predicated region
      $region33: #{tpu_custom_call.1} parent=5 // pred_check
        _
      $region34: #{tpu_custom_call.1} parent=5 // pred_check_branch
        %229 = sbr.rel (%p226) target = $region36
      $region35: #{tpu_custom_call.1} parent=5 // pred_region
        %s230 = ssub.s32 %s18, 1
        %p231 = scmp.lt.s32.totalorder %s27, 1
        %s232 = scalar_select %p231, %s27, 1
        %p233 = scmp.lt.s32.totalorder %s28, 0
        %s234 = scalar_select %p233, %s28, 0
        %s235 = sadd.s32 %s234, %s232
        %s236 = smul.addr %s235, 8
        %s237 = scalar_lea.vmem %s0, %s236
        %p238 = pneg %p58
        %p239 = pneg %p55
        %p240 = scmp.lt.s32.totalorder %s27, 1
        %s241 = scalar_select %p240, %s27, 1
        %s242 = smul.addr %s241, 8
        %s243 = scalar_lea.vmem %s1, %s242
        %p244 = pneg %p84
        %p245 = pneg %p81
        %p246 = pneg %p105
        %p247 = pneg %p102
        %p248 = pneg %p126
        %p249 = pneg %p123
        %p250 = pneg %p154
        %p251 = pneg %p151
        %s252 = sand.u32 %s141, 1
        %s253 = scalar_lea.sflag [#allocation3], %s252
        %s254 = sand.u32 %s141, 1
        %s255 = smul.addr %s254, 8
        %s256 = scalar_lea.vmem [#allocation2], %s255
        %p257 = pneg %p182
        %p258 = pneg %p179
        %s259 = sand.u32 %s169, 1
        %s260 = scalar_lea.sflag [#allocation5], %s259
        %s261 = sand.u32 %s169, 1
        %s262 = smul.addr %s261, 8
        %s263 = scalar_lea.vmem [#allocation4], %s262
        %p264 = scmp.lt.s32.totalorder %s27, 1
        %s265 = scalar_select %p264, %s27, 1
        %p266 = scmp.lt.s32.totalorder %s28, 0
        %s267 = scalar_select %p266, %s28, 0
        %s268 = sadd.s32 %s267, %s265
        %s269 = smul.addr %s268, 8
        %s270 = scalar_lea.vmem %s0, %s269
        %p271 = scmp.lt.s32.totalorder %s27, 1
        %s272 = scalar_select %p271, %s27, 1
        %s273 = smul.addr %s272, 8
        %s274 = scalar_lea.vmem %s1, %s273
        %v276 = vld [vmem:[%s270] sm:$0xff]
        %v277 = vld [vmem:[%s274] sm:$0xff]
        %vm278 = vcmask 261120
        %v280 = vsel %vm278, %v276, 0
        %v283 = vsel %vm278, %v277, 0
        %285 = vmatprep.subr.mxu0 0.0
        %286 = vmatpush1.xpose.msra.mxu0 0.0
        %287 = vmatprep.subr.mxu0 0.0
        %288 = vmatpush1.xpose.msra.mxu0 0.0
        %289 = vmatprep.subr.mxu0 0.0
        %290 = vmatpush1.xpose.msra.mxu0 0.0
        %291 = vmatprep.subr.mxu0 0.0
        %292 = vmatpush1.xpose.msra.mxu0 0.0
        %293 = vmatprep.subr.mxu0 0.0
        %294 = vmatpush1.xpose.msra.mxu0 0.0
        %295 = vmatprep.subr.mxu0 0.0
        %296 = vmatpush1.xpose.msra.mxu0 0.0
        %297 = vmatprep.subr.mxu0 0.0
        %298 = vmatpush1.xpose.msra.mxu0 0.0
        %299 = vmatprep.subr.mxu0 0.0
        %300 = vmatpush1.xpose.msra.mxu0 0.0
        %301 = vmatprep.subr.mxu0 0.0
        %302 = vmatpush1.xpose.msra.mxu0 0.0
        %303 = vmatprep.subr.mxu0 0.0
        %304 = vmatpush1.xpose.msra.mxu0 0.0
        %305 = vmatprep.subr.mxu0 0.0
        %306 = vmatpush1.xpose.msra.mxu0 0.0
        %307 = vmatprep.subr.mxu0 0.0
        %308 = vmatpush1.xpose.msra.mxu0 0.0
        %309 = vmatprep.subr.mxu0 0.0
        %310 = vmatpush1.xpose.msra.mxu0 0.0
        %311 = vmatprep.subr.mxu0 0.0
        %312 = vmatpush1.xpose.msra.mxu0 0.0
        %313 = vmatprep.subr.mxu0 0.0
        %314 = vmatpush1.xpose.msra.mxu0 0.0
        %315 = vmatprep.subr.mxu0 0.0
        %316 = vmatpush1.xpose.msra.mxu0 %v283
        %317 = vmatprep.subr.mxu0 0.0
        %318 = vmatpush2.xpose.msra.mxu0 0.0
        %319 = vmatprep.subr.mxu0 0.0
        %320 = vmatpush2.xpose.msra.mxu0 0.0
        %321 = vmatprep.subr.mxu0 0.0
        %322 = vmatpush2.xpose.msra.mxu0 0.0
        %323 = vmatprep.subr.mxu0 0.0
        %324 = vmatpush2.xpose.msra.mxu0 0.0
        %325 = vmatprep.subr.mxu0 0.0
        %326 = vmatpush2.xpose.msra.mxu0 0.0
        %327 = vmatprep.subr.mxu0 0.0
        %328 = vmatpush2.xpose.msra.mxu0 0.0
        %329 = vmatprep.subr.mxu0 0.0
        %330 = vmatpush2.xpose.msra.mxu0 0.0
        %331 = vmatprep.subr.mxu0 0.0
        %332 = vmatpush2.xpose.msra.mxu0 0.0
        %333 = vmatprep.subr.mxu0 0.0
        %334 = vmatpush2.xpose.msra.mxu0 0.0
        %335 = vmatprep.subr.mxu0 0.0
        %336 = vmatpush2.xpose.msra.mxu0 0.0
        %337 = vmatprep.subr.mxu0 0.0
        %338 = vmatpush2.xpose.msra.mxu0 0.0
        %339 = vmatprep.subr.mxu0 0.0
        %340 = vmatpush2.xpose.msra.mxu0 0.0
        %341 = vmatprep.subr.mxu0 0.0
        %342 = vmatpush2.xpose.msra.mxu0 0.0
        %343 = vmatprep.subr.mxu0 0.0
        %344 = vmatpush2.xpose.msra.mxu0 0.0
        %345 = vmatprep.subr.mxu0 0.0
        %346 = vmatpush2.xpose.msra.mxu0 0.0
        %347 = vmatprep.subr.mxu0 0.0
        %348 = vmatpush2.xpose.msra.mxu0 0.0
        %349 = vmatprep.mubr.f32.mxu0 0.0
        %350 = vmatmul.mubr.f32.gmra.mxu0 %v280
        %v351 = vpop.f32.mrf.mxu0
        %v352 = vadd.f32 0.0, %v351
        %v353 = vpop.f32.mrf.mxu0
        %354 = vdwg.mxu0
        %vm355 = vcmp.eq.f32.partialorder %v352, 0.0
        %v356 = vsel %vm355, -inf, %v352
        %vm357 = vcmask 64512
        %v358 = vsel %vm357, %v356, -inf
        %359 = vmax.xlane.f32.xlu0 %v358
        %v360 = vpop.xlane.xlu0 %359
        %v361 = vsub.f32 %v356, %v360
        %v362 = vmul.f32 %v361, 1.442695
        %v363 = vpow.pop %v362
        %v364 = vsel %vm357, %v363, 0.0
        %365 = vadd.xlane.f32.xlu0 %v364
        %v366 = vpop.xlane.xlu0 %365
        %v367 = vrcp.pop %v366
        %v368 = vmul.f32 1.0, %v367
        %v369 = vmul.f32 %v363, %v368
        %v370 = vpack.c.bf16 %v369, %v369
        %v371 = vpack.c.bf16 %v277, %v277
        %v373 = vsel %vm357, %v370, 0
        %vm375 = vcmask 1043456
        %v377 = vsel %vm375, %v371, 0
        %379 = vmatprep.subr.bf16.mxu0 0
        %380 = vmatpush1.bf16.msra.mxu0 0
        %381 = vmatprep.subr.bf16.mxu0 0
        %382 = vmatpush1.bf16.msra.mxu0 0
        %383 = vmatprep.subr.bf16.mxu0 0
        %384 = vmatpush1.bf16.msra.mxu0 0
        %385 = vmatprep.subr.bf16.mxu0 0
        %386 = vmatpush1.bf16.msra.mxu0 0
        %387 = vmatprep.subr.bf16.mxu0 0
        %388 = vmatpush1.bf16.msra.mxu0 0
        %389 = vmatprep.subr.bf16.mxu0 0
        %390 = vmatpush1.bf16.msra.mxu0 0
        %391 = vmatprep.subr.bf16.mxu0 0
        %392 = vmatpush1.bf16.msra.mxu0 0
        %393 = vmatprep.subr.bf16.mxu0 0
        %394 = vmatpush1.bf16.msra.mxu0 %v377
        %395 = vmatprep.subr.bf16.mxu0 0
        %396 = vmatpush2.bf16.msra.mxu0 0
        %397 = vmatprep.subr.bf16.mxu0 0
        %398 = vmatpush2.bf16.msra.mxu0 0
        %399 = vmatprep.subr.bf16.mxu0 0
        %400 = vmatpush2.bf16.msra.mxu0 0
        %401 = vmatprep.subr.bf16.mxu0 0
        %402 = vmatpush2.bf16.msra.mxu0 0
        %403 = vmatprep.subr.bf16.mxu0 0
        %404 = vmatpush2.bf16.msra.mxu0 0
        %405 = vmatprep.subr.bf16.mxu0 0
        %406 = vmatpush2.bf16.msra.mxu0 0
        %407 = vmatprep.subr.bf16.mxu0 0
        %408 = vmatpush2.bf16.msra.mxu0 0
        %409 = vmatprep.subr.bf16.mxu0 0
        %410 = vmatpush2.bf16.msra.mxu0 0
        %411 = vmatprep.mubr.bf16.mxu0 0
        %412 = vmatmul.mubr.bf16.gmra.mxu0 %v373
        %v413 = vpop.f32.mrf.mxu0
        %v414 = vadd.f32 0.0, %v413
        %v415 = vpop.f32.mrf.mxu0
        %v416 = vpop.f32.mrf.mxu0
        %v417 = vpop.f32.mrf.mxu0
        %418 = vdwg.mxu0
        %v419 = vpack.c.bf16 %v414, %v414
        %v420 = vld [vmem:[%s2] sm:$0xf]
        %v421 = vld [vmem:[%s2 + $0x4] sm:$0xf]
        %v422 = vld [vmem:[%s2 + $0x8] sm:$0xf]
        %v423 = vld [vmem:[%s2 + $0xc] sm:$0xf]
        %v424 = vpack.c.bf16 %v276, %v276
        %v425 = vld [vmem:[%s2 + $0x10] sm:$0xf]
        %v426 = vld [vmem:[%s2 + $0x14] sm:$0xf]
        %v427 = vld [vmem:[%s2 + $0x18] sm:$0xf]
        %v428 = vld [vmem:[%s2 + $0x1c] sm:$0xf]
        %v433 = vunpack.c.l.b16 %v425
        %v434 = vunpack.c.l.b16 %v426
        %v435 = vunpack.c.l.b16 %v427
        %v436 = vunpack.c.l.b16 %v428
        %v437 = vpack.c.b16 %v434, %v433
        %v438 = vpack.c.b16 %v436, %v435
        %v442 = vsel %vm278, %v424, 0
        %444 = vmatprep.subr.bf16.mxu0 0
        %445 = vmatpush1.bf16.msra.mxu0 0
        %446 = vmatprep.subr.bf16.mxu0 0
        %447 = vmatpush1.bf16.msra.mxu0 0
        %448 = vmatprep.subr.bf16.mxu0 0
        %449 = vmatpush1.bf16.msra.mxu0 0
        %450 = vmatprep.subr.bf16.mxu0 0
        %451 = vmatpush1.bf16.msra.mxu0 0
        %452 = vmatprep.subr.bf16.mxu0 0
        %453 = vmatpush1.bf16.msra.mxu0 0
        %454 = vmatprep.subr.bf16.mxu0 0
        %455 = vmatpush1.bf16.msra.mxu0 0
        %456 = vmatprep.subr.bf16.mxu0 0
        %457 = vmatpush1.bf16.msra.mxu0 %v438
        %458 = vmatprep.subr.bf16.mxu0 0
        %459 = vmatpush1.bf16.msra.mxu0 %v437
        %460 = vmatprep.subr.bf16.mxu0 0
        %461 = vmatpush2.bf16.msra.mxu0 0
        %462 = vmatprep.subr.bf16.mxu0 0
        %463 = vmatpush2.bf16.msra.mxu0 0
        %464 = vmatprep.subr.bf16.mxu0 0
        %465 = vmatpush2.bf16.msra.mxu0 0
        %466 = vmatprep.subr.bf16.mxu0 0
        %467 = vmatpush2.bf16.msra.mxu0 0
        %468 = vmatprep.subr.bf16.mxu0 0
        %469 = vmatpush2.bf16.msra.mxu0 0
        %470 = vmatprep.subr.bf16.mxu0 0
        %471 = vmatpush2.bf16.msra.mxu0 0
        %472 = vmatprep.subr.bf16.mxu0 0
        %473 = vmatpush2.bf16.msra.mxu0 0
        %474 = vmatprep.subr.bf16.mxu0 0
        %475 = vmatpush2.bf16.msra.mxu0 0
        %476 = vmatprep.mubr.bf16.mxu0 0
        %477 = vmatmul.mubr.bf16.gmra.mxu0 %v442
        %v478 = vpop.f32.mrf.mxu0
        %v479 = vadd.f32 0.0, %v478
        %v480 = vpop.f32.mrf.mxu0
        %v481 = vpop.f32.mrf.mxu0
        %v482 = vpop.f32.mrf.mxu0
        %483 = vdwg.mxu0
        %v488 = vunpack.c.l.b16 %v420
        %v489 = vunpack.c.l.b16 %v421
        %v490 = vunpack.c.l.b16 %v422
        %v491 = vunpack.c.l.b16 %v423
        %v492 = vpack.c.b16 %v489, %v488
        %v493 = vpack.c.b16 %v491, %v490
        %v497 = vsel %vm278, %v419, 0
        %499 = vmatprep.subr.bf16.mxu0 0
        %500 = vmatpush1.bf16.msra.mxu0 0
        %501 = vmatprep.subr.bf16.mxu0 0
        %502 = vmatpush1.bf16.msra.mxu0 0
        %503 = vmatprep.subr.bf16.mxu0 0
        %504 = vmatpush1.bf16.msra.mxu0 0
        %505 = vmatprep.subr.bf16.mxu0 0
        %506 = vmatpush1.bf16.msra.mxu0 0
        %507 = vmatprep.subr.bf16.mxu0 0
        %508 = vmatpush1.bf16.msra.mxu0 0
        %509 = vmatprep.subr.bf16.mxu0 0
        %510 = vmatpush1.bf16.msra.mxu0 0
        %511 = vmatprep.subr.bf16.mxu0 0
        %512 = vmatpush1.bf16.msra.mxu0 %v493
        %513 = vmatprep.subr.bf16.mxu0 0
        %514 = vmatpush1.bf16.msra.mxu0 %v492
        %515 = vmatprep.subr.bf16.mxu0 0
        %516 = vmatpush2.bf16.msra.mxu0 0
        %517 = vmatprep.subr.bf16.mxu0 0
        %518 = vmatpush2.bf16.msra.mxu0 0
        %519 = vmatprep.subr.bf16.mxu0 0
        %520 = vmatpush2.bf16.msra.mxu0 0
        %521 = vmatprep.subr.bf16.mxu0 0
        %522 = vmatpush2.bf16.msra.mxu0 0
        %523 = vmatprep.subr.bf16.mxu0 0
        %524 = vmatpush2.bf16.msra.mxu0 0
        %525 = vmatprep.subr.bf16.mxu0 0
        %526 = vmatpush2.bf16.msra.mxu0 0
        %527 = vmatprep.subr.bf16.mxu0 0
        %528 = vmatpush2.bf16.msra.mxu0 0
        %529 = vmatprep.subr.bf16.mxu0 0
        %530 = vmatpush2.bf16.msra.mxu0 0
        %531 = vmatprep.mubr.bf16.mxu0 0
        %532 = vmatmul.mubr.bf16.gmra.mxu0 %v497
        %v533 = vpop.f32.mrf.mxu0
        %v534 = vadd.f32 %v479, %v533
        %v535 = vpop.f32.mrf.mxu0
        %v536 = vpop.f32.mrf.mxu0
        %v537 = vpop.f32.mrf.mxu0
        %538 = vdwg.mxu0
        %v539 = vld [vmem:[%s3] sm:$0x1]
        %v541 = vlaneseq
        %v542 = vshrl.u32 %v541, 7
        %v543 = vsub.s32 0, %v542
        %v544 = vrot.slane %v539, %v543
        %v546 = vadd.f32 %v534, %v544
        %v547 = vtanh.pop %v546
        %548 = vst.msk [vmem:[%s256] sm:$0xff] %vm278, %v547
        %549 = vst.msk [vmem:[%s263] sm:$0xff] %vm357, %v369
        %s550 = sand.u32 %s141, 1
        %s551 = scalar_lea.sflag [#allocation3], %s550
        %s552 = sand.u32 %s141, 1
        %s553 = smul.addr %s552, 8
        %s554 = scalar_lea.vmem [#allocation2], %s553
        %s555 = sand.u32 %s169, 1
        %s556 = scalar_lea.sflag [#allocation5], %s555
        %s557 = sand.u32 %s169, 1
        %s558 = smul.addr %s557, 8
        %s559 = scalar_lea.vmem [#allocation4], %s558
        // Predicated region
        $region37: #{tpu_custom_call.1} parent=35 // pred_check
          %p560 = pneg %p151
        $region38: #{tpu_custom_call.1} parent=35 // pred_check_branch
          %562 = sbr.rel (%p560) target = $region40
        $region39: #{tpu_custom_call.1} parent=35 // pred_region
          %s564 = ssub.s32 128, 128
          %565 = vsyncadd %s551, %s564
          %s566 = sadd.s32 %s28, %s27
          %s567 = smul.addr %s566, 128
          %s568 = scalar_lea.hbm %s4, %s567
          %s570 = sshll.u32 %s554, 4
          %s571 = int_to_ptr.vmem [resolvable:$true] %s570
          %573 = dma.vmem_to_hbm [thread:$0]  %s571, 128, %s568, %s551
        $region40: #{tpu_custom_call.1} parent=35 // pred_fallthru
          _
        // Predicated region
        $region41: #{tpu_custom_call.1} parent=35 // pred_check
          %p574 = pneg %p179
        $region42: #{tpu_custom_call.1} parent=35 // pred_check_branch
          %576 = sbr.rel (%p574) target = $region44
        $region43: #{tpu_custom_call.1} parent=35 // pred_region
          %s578 = ssub.s32 128, 128
          %579 = vsyncadd %s556, %s578
          %s580 = sadd.s32 %s28, %s27
          %s581 = smul.addr %s580, 128
          %s582 = scalar_lea.hbm %s5, %s581
          %s584 = sshll.u32 %s559, 4
          %s585 = int_to_ptr.vmem [resolvable:$true] %s584
          %587 = dma.vmem_to_hbm [thread:$0]  %s585, 128, %s582, %s556
        $region44: #{tpu_custom_call.1} parent=35 // pred_fallthru
          _
      $region36: #{tpu_custom_call.1} parent=5 // pred_fallthru
        _
      %p588 = scmp.le.s32.totalorder 2, %s18
      // Predicated region
      $region45: #{tpu_custom_call.1} parent=5 // pred_check
        %p589 = pneg %p588
      $region46: #{tpu_custom_call.1} parent=5 // pred_check_branch
        %591 = sbr.rel (%p589) target = $region48
      $region47: #{tpu_custom_call.1} parent=5 // pred_region
        %s592 = ssub.s32 %s18, 2
        // Predicated region
        $region49: #{tpu_custom_call.1} parent=47 // pred_check
          %p593 = pneg %p157
        $region50: #{tpu_custom_call.1} parent=47 // pred_check_branch
          %595 = sbr.rel (%p593) target = $region52
        $region51: #{tpu_custom_call.1} parent=47 // pred_region
          %s596 = sand.u32 %s142, 1
          %s597 = scalar_lea.sflag [#allocation3], %s596
          %s598 = sand.u32 %s142, 1
          %s599 = smul.addr %s598, 8
          %s600 = scalar_lea.vmem [#allocation2], %s599
          %601 = dma.done %s597, 128
        $region52: #{tpu_custom_call.1} parent=47 // pred_fallthru
          _
        // Predicated region
        $region53: #{tpu_custom_call.1} parent=47 // pred_check
          %p602 = pneg %p185
        $region54: #{tpu_custom_call.1} parent=47 // pred_check_branch
          %604 = sbr.rel (%p602) target = $region56
        $region55: #{tpu_custom_call.1} parent=47 // pred_region
          %s605 = sand.u32 %s170, 1
          %s606 = scalar_lea.sflag [#allocation5], %s605
          %s607 = sand.u32 %s170, 1
          %s608 = smul.addr %s607, 8
          %s609 = scalar_lea.vmem [#allocation4], %s608
          %610 = dma.done %s606, 128
        $region56: #{tpu_custom_call.1} parent=47 // pred_fallthru
          _
      $region48: #{tpu_custom_call.1} parent=5 // pred_fallthru
        _
    $region6: #{tpu_custom_call.1} parent=1 // loop_footer
      %s22 = sadd.s32 1, %s18
    $region7: #{tpu_custom_call.1} parent=1 // loop_footer_branch
      %17 = sbr.rel target = $region3
    $region8: #{tpu_custom_call.1} parent=1 // loop_exit
      _
    %611 = vsyncpa [#allocation3], 1
    %s612 = scalar_lea.sflag [#allocation3], 1
    %613 = vsyncpa %s612, 1
    %614 = vsyncpa [#allocation5], 1
    %s615 = scalar_lea.sflag [#allocation5], 1
    %616 = vsyncpa %s615, 1

</llo_original>
